<compile_context>
chip_gen: v7x
topology: tpu7x:2x2x1
jax: 0.10.0
libtpu: 0.0.40
codegen_flags: <defaults>
</compile_context>

<pallas_src>
import functools

import jax
import jax.numpy as jnp
from jax.experimental import pallas as pl
from jax.experimental.pallas import tpu as pltpu


# ----------------------------- kernel ---------------------------------------

def _mlp_head_kernel(x_ref, w1_ref, b1_ref, w2_ref, b2_ref, w3_ref, b3_ref,
                     o_ref, acc_ref):
    """One (batch-tile, K-tile) grid step.

    Layer 1 (x @ W1) is accumulated over the K grid axis into an f32 VMEM
    scratch; bias+ReLU and layers 2/3 run once on the last K step.
    """
    k = pl.program_id(1)
    cd = w1_ref.dtype  # MXU compute dtype (bf16); x is cast per-tile in-kernel.

    @pl.when(k == 0)
    def _():
        acc_ref[...] = jnp.zeros_like(acc_ref)

    acc_ref[...] += jnp.dot(x_ref[...].astype(cd), w1_ref[...],
                            preferred_element_type=jnp.float32)

    @pl.when(k == pl.num_programs(1) - 1)
    def _():
        # Bias-add / ReLU stay in f32 (v5e VPU has no bf16).
        h = jnp.maximum(acc_ref[...] + b1_ref[...], 0.0)
        h = jnp.dot(h.astype(cd), w2_ref[...], preferred_element_type=jnp.float32)
        h = jnp.maximum(h + b2_ref[...], 0.0)
        out = jnp.dot(h.astype(cd), w3_ref[...], preferred_element_type=jnp.float32)
        o_ref[...] = (out + b3_ref[...]).astype(o_ref.dtype)


# ------------------------ one-time param preparation -------------------------

def _round_up(x, m):
    return ((x + m - 1) // m) * m


def _pad_to(x, axis, target):
    pad = target - x.shape[axis]
    if pad == 0:
        return x
    widths = [(0, 0)] * x.ndim
    widths[axis] = (0, pad)
    return jnp.pad(x, widths)


def prepare_params(raw_params, compute_dtype=jnp.bfloat16):
    """One-time parameter preparation (call once, NOT per forward pass).

    * Casts weights to the MXU compute dtype (halves steady-state weight DMA).
    * Zero-pads hidden dims and the class dim up to multiples of 128 so every
      MXU N-dimension is lane-dense and the output store is a full-lane vst.
      Zero padding is exact: padded hidden units stay 0 through ReLU and padded
      logits are exactly 0 (sliced off in the wrapper).

    Returns (prepared_params, num_classes).
    """
    w1, b1 = raw_params["w1"], raw_params["b1"]
    w2, b2 = raw_params["w2"], raw_params["b2"]
    w3, b3 = raw_params["w3"], raw_params["b3"]
    num_classes = w3.shape[1]
    h1p = _round_up(w1.shape[1], 128)
    h2p = _round_up(w2.shape[1], 128)
    cp = _round_up(num_classes, 128)
    prepared = {
        "w1": _pad_to(w1.astype(compute_dtype), 1, h1p),
        "b1": _pad_to(b1.astype(jnp.float32).reshape(1, -1), 1, h1p),
        "w2": _pad_to(_pad_to(w2.astype(compute_dtype), 0, h1p), 1, h2p),
        "b2": _pad_to(b2.astype(jnp.float32).reshape(1, -1), 1, h2p),
        "w3": _pad_to(_pad_to(w3.astype(compute_dtype), 0, h2p), 1, cp),
        "b3": _pad_to(b3.astype(jnp.float32).reshape(1, -1), 1, cp),
    }
    return prepared, num_classes


# ----------------------------- tiling / budget --------------------------------

def _vmem_budget_bytes():
    """Generation-aware VMEM budget with headroom for compiler scratch."""
    try:
        cap = int(pltpu.get_tpu_info().vmem_capacity_bytes)
    except Exception:
        cap = 64 << 20  # conservative fallback (v7x-sized)
    return int(min(cap * 0.85, cap - (8 << 20)))


def _default_min_batch_steps():
    """>=2 (even) batch grid steps on 2-TensorCore parts so megacore has work."""
    try:
        kind = jax.devices()[0].device_kind.lower()
        if "v7" in kind:
            return 2
    except Exception:
        pass
    return 1


def _pick_tiles(batch, d, h1p, h2p, cp, x_item, c_item, o_item, budget,
                min_batch_steps):
    def est(tb, tk):
        weights = 2 * ((tk * h1p + h1p * h2p + h2p * cp) * c_item
                       + (h1p + h2p + cp) * 4)
        return (weights
                + 2 * tb * tk * x_item        # double-buffered x tiles
                + 2 * tb * cp * o_item        # double-buffered output tiles
                + tb * h1p * 4                # f32 layer-1 accumulator scratch
                + tb * (h1p + h2p + cp) * 4)  # f32 intermediates (headroom)

    # K tiles: prefer the full input dim (no split); else lane-aligned divisors.
    tk_cands = [d] + [t for t in range((d // 128) * 128, 0, -128)
                      if t != d and d % t == 0]

    # Batch tiles: largest first, multiples of 8 (or the full batch), cap 1024.
    cap_rows = min(batch, 1024)
    tb_cands = sorted({t for t in range(8, cap_rows + 1, 8) if batch % t == 0}
                      | ({batch} if batch <= 1024 else set()),
                      reverse=True)
    if not tb_cands:
        tb_cands = [batch]  # tiny batch (<8 rows): single full-array block

    def ok_steps(tb):
        steps = batch // tb
        return steps >= min_batch_steps and steps % max(min_batch_steps, 1) == 0

    for require_steps in (True, False):
        for tb in tb_cands:
            if require_steps and not ok_steps(tb):
                continue
            for tk in tk_cands:
                if est(tb, tk) <= budget:
                    return tb, tk, est(tb, tk)
    return tb_cands[-1], tk_cands[-1], est(tb_cands[-1], tk_cands[-1])


# ----------------------------- wrapper ----------------------------------------

def mlp_prediction_head(x, prepared_params, *, num_classes, out_dtype=None,
                        return_padded=False, batch_tile=None, k_tile=None):
    """Fused MLP prediction head (eval mode).

    x:               (..., input_dim)
    prepared_params: output of prepare_params() (bf16 weights, lane-padded dims)
    Returns (..., num_classes) logits in out_dtype (defaults to x.dtype).
    """
    orig_shape = x.shape
    if x.ndim != 2:
        x = x.reshape(-1, orig_shape[-1])
    batch, d = x.shape

    p = prepared_params
    h1p = p["w1"].shape[1]
    h2p = p["w2"].shape[1]
    cp = p["w3"].shape[1]
    c_dtype = p["w1"].dtype
    out_dtype = x.dtype if out_dtype is None else out_dtype

    x_item = jnp.dtype(x.dtype).itemsize
    c_item = jnp.dtype(c_dtype).itemsize
    o_item = jnp.dtype(out_dtype).itemsize

    budget = _vmem_budget_bytes()
    tb, tk, vmem_est = _pick_tiles(batch, d, h1p, h2p, cp, x_item, c_item,
                                   o_item, budget, _default_min_batch_steps())
    if batch_tile is not None:
        tb = batch_tile
    if k_tile is not None:
        tk = k_tile
    assert batch % tb == 0, f"batch_tile={tb} must divide batch={batch}"
    assert d % tk == 0, f"k_tile={tk} must divide input_dim={d}"
    grid = (batch // tb, d // tk)

    vmem_limit = int(min(max(2 * vmem_est + (4 << 20), 16 << 20), budget))

    cost = pl.CostEstimate(
        flops=2 * batch * (d * h1p + h1p * h2p + h2p * cp),
        transcendentals=0,
        bytes_accessed=(batch * d * x_item
                        + (d * h1p + h1p * h2p + h2p * cp) * c_item
                        + (h1p + h2p + cp) * 4
                        + batch * cp * o_item),
    )

    inv = lambda i, k: (0, 0)  # grid-invariant weight / bias blocks
    padded = pl.pallas_call(
        _mlp_head_kernel,
        out_shape=jax.ShapeDtypeStruct((batch, cp), out_dtype),
        grid_spec=pltpu.PrefetchScalarGridSpec(
            num_scalar_prefetch=0,
            grid=grid,
            in_specs=[
                pl.BlockSpec((tb, tk), lambda i, k: (i, k)),    # x: batch & K tiled
                pl.BlockSpec((tk, h1p), lambda i, k: (k, 0)),   # W1: K tiled
                pl.BlockSpec((1, h1p), inv),                    # b1
                pl.BlockSpec((h1p, h2p), inv),                  # W2
                pl.BlockSpec((1, h2p), inv),                    # b2
                pl.BlockSpec((h2p, cp), inv),                   # W3
                pl.BlockSpec((1, cp), inv),                     # b3
            ],
            out_specs=pl.BlockSpec((tb, cp), lambda i, k: (i, 0)),
            scratch_shapes=[pltpu.VMEM((tb, h1p), jnp.float32)],
        ),
        compiler_params=pltpu.CompilerParams(
            dimension_semantics=("parallel", "arbitrary"),
            vmem_limit_bytes=vmem_limit,
        ),
        cost_estimate=cost,
    )(x, p["w1"], p["b1"], p["w2"], p["b2"], p["w3"], p["b3"])

    out = padded if (return_padded or num_classes == cp) else padded[:, :num_classes]
    if len(orig_shape) != 2:
        out = out.reshape(*orig_shape[:-1], out.shape[-1])
    return out


# ----------------------------- init / reference --------------------------------

def init_params(key, input_dim, hidden_dims, num_classes, dtype=jnp.float32):
    """Deterministic init matching nn.Linear default (uniform +/- 1/sqrt(fan_in))."""
    dims = [input_dim] + list(hidden_dims) + [num_classes]
    params = {}
    for li, (din, dout) in enumerate(zip(dims[:-1], dims[1:]), start=1):
        key, kw, kb = jax.random.split(key, 3)
        bound = 1.0 / jnp.sqrt(jnp.asarray(din, dtype))
        params[f"w{li}"] = jax.random.uniform(kw, (din, dout), dtype, -bound, bound)
        params[f"b{li}"] = jax.random.uniform(kb, (1, dout), dtype, -bound, bound)
    return params


def reference_forward(x, params, compute_dtype=jnp.bfloat16):
    """Pure-JAX reference mirroring the kernel's bf16-operand / f32-accumulate math."""
    cd = compute_dtype
    h = jnp.dot(x.astype(cd), params["w1"].astype(cd),
                preferred_element_type=jnp.float32) + params["b1"]
    h = jnp.maximum(h, 0.0)
    h = jnp.dot(h.astype(cd), params["w2"].astype(cd),
                preferred_element_type=jnp.float32) + params["b2"]
    h = jnp.maximum(h, 0.0)
    return jnp.dot(h.astype(cd), params["w3"].astype(cd),
                   preferred_element_type=jnp.float32) + params["b3"]


if __name__ == "__main__":
    # MLPPredictionHead(input_dim=32, num_classes=10, hidden_dims=[64, 32],
    #                   activation="relu", dropout=0.1 -> identity at eval)
    key = jax.random.PRNGKey(0)
    key, kx = jax.random.split(key)

    batch, input_dim, hidden_dims, num_classes = 64, 32, [64, 32], 10
    x = jax.random.normal(kx, (batch, input_dim), dtype=jnp.float32)
    raw_params = init_params(key, input_dim, hidden_dims, num_classes)

    # One-time preparation (bf16 cast + lane padding) outside the per-call path.
    prepared, n_cls = prepare_params(raw_params)
    head = jax.jit(functools.partial(mlp_prediction_head, num_classes=n_cls))

    logits = head(x, prepared)
    logits = jax.block_until_ready(logits)

    ref = reference_forward(x, raw_params)
    assert logits.shape == (batch, num_classes), logits.shape
    max_err = jnp.max(jnp.abs(logits - ref))
    assert jnp.allclose(logits, ref, atol=1e-2, rtol=1e-2), (
        f"mismatch vs reference (max abs err {max_err})")

    print("KERNEL_OK")
</pallas_src>

<mosaic_0001>
module attributes {stable_mosaic.version = 11 : i64} {
  func.func @_mlp_head_kernel(%arg0: i32, %arg1: i32, %arg2: memref<64x32xf32, #tpu.memory_space<vmem>>, %arg3: memref<32x128xbf16, #tpu.memory_space<vmem>>, %arg4: memref<1x128xf32, #tpu.memory_space<vmem>>, %arg5: memref<128x128xbf16, #tpu.memory_space<vmem>>, %arg6: memref<1x128xf32, #tpu.memory_space<vmem>>, %arg7: memref<128x128xbf16, #tpu.memory_space<vmem>>, %arg8: memref<1x128xf32, #tpu.memory_space<vmem>>, %arg9: memref<64x128xf32, #tpu.memory_space<vmem>>, %arg10: memref<64x128xf32, #tpu.memory_space<vmem>>) attributes {dimension_semantics = [#tpu.dimension_semantics<parallel>, #tpu.dimension_semantics<arbitrary>], iteration_bounds = array<i64: 1, 1>, scalar_prefetch = 0 : i64, scratch_operands = 1 : i64, tpu.core_type = #tpu.core_type<tc>, window_params = [{transform_indices = @transform_0, window_bounds = array<i64: 64, 32>}, {transform_indices = @transform_1, window_bounds = array<i64: 32, 128>}, {pipeline_mode = #tpu.pipeline_mode<synchronous>, transform_indices = @transform_2, window_bounds = array<i64: 1, 128>}, {pipeline_mode = #tpu.pipeline_mode<synchronous>, transform_indices = @transform_3, window_bounds = array<i64: 128, 128>}, {pipeline_mode = #tpu.pipeline_mode<synchronous>, transform_indices = @transform_4, window_bounds = array<i64: 1, 128>}, {pipeline_mode = #tpu.pipeline_mode<synchronous>, transform_indices = @transform_5, window_bounds = array<i64: 128, 128>}, {pipeline_mode = #tpu.pipeline_mode<synchronous>, transform_indices = @transform_6, window_bounds = array<i64: 1, 128>}, {transform_indices = @transform_7, window_bounds = array<i64: 64, 128>}]} {
    %c0_i32 = arith.constant 0 : i32
    %0 = arith.cmpi eq, %arg1, %c0_i32 : i32
    %1 = arith.extui %0 : i1 to i32
    %c0_i32_0 = arith.constant 0 : i32
    %2 = arith.cmpi ne, %1, %c0_i32_0 : i32
    scf.if %2 {
      %cst_10 = arith.constant 0.000000e+00 : f32
      %13 = vector.broadcast %cst_10 : f32 to vector<64x128xf32>
      %c0_11 = arith.constant 0 : index
      %c0_12 = arith.constant 0 : index
      %14 = vector.load %arg10[%c0_11, %c0_12] : memref<64x128xf32, #tpu.memory_space<vmem>>, vector<64x128xf32>
      tpu.vector_store %arg10[%c0_11, %c0_12], %13 {strides = array<i32>} : memref<64x128xf32, #tpu.memory_space<vmem>>, vector<64x128xf32>,
    } else {
    }
    %c0 = arith.constant 0 : index
    %c0_1 = arith.constant 0 : index
    %3 = vector.load %arg10[%c0, %c0_1] : memref<64x128xf32, #tpu.memory_space<vmem>>, vector<64x128xf32>
    %c0_2 = arith.constant 0 : index
    %c0_3 = arith.constant 0 : index
    %4 = vector.load %arg2[%c0_2, %c0_3] : memref<64x32xf32, #tpu.memory_space<vmem>>, vector<64x32xf32>
    %5 = arith.truncf %4 : vector<64x32xf32> to vector<64x32xbf16>
    %c0_4 = arith.constant 0 : index
    %c0_5 = arith.constant 0 : index
    %6 = vector.load %arg3[%c0_4, %c0_5] : memref<32x128xbf16, #tpu.memory_space<vmem>>, vector<32x128xbf16>
    %cst = arith.constant dense<0.000000e+00> : vector<64x128xf32>
    %7 = tpu.matmul %5, %6, %cst {dimension_numbers = #tpu.dot_dimension_numbers<[1], [0], [0], [1], [0, 0, 1, 1], [], []>} : vector<64x32xbf16>, vector<32x128xbf16>, vector<64x128xf32> -> vector<64x128xf32>
    %8 = arith.addf %3, %7 : vector<64x128xf32>
    %c0_6 = arith.constant 0 : index
    %c0_7 = arith.constant 0 : index
    %9 = vector.load %arg10[%c0_6, %c0_7] : memref<64x128xf32, #tpu.memory_space<vmem>>, vector<64x128xf32>
    tpu.vector_store %arg10[%c0_6, %c0_7], %8 {strides = array<i32>} : memref<64x128xf32, #tpu.memory_space<vmem>>, vector<64x128xf32>,
    %c0_i32_8 = arith.constant 0 : i32
    %10 = arith.cmpi eq, %arg1, %c0_i32_8 : i32
    %11 = arith.extui %10 : i1 to i32
    %c0_i32_9 = arith.constant 0 : i32
    %12 = arith.cmpi ne, %11, %c0_i32_9 : i32
    scf.if %12 {
      %c0_10 = arith.constant 0 : index
      %c0_11 = arith.constant 0 : index
      %13 = vector.load %arg10[%c0_10, %c0_11] : memref<64x128xf32, #tpu.memory_space<vmem>>, vector<64x128xf32>
      %c0_12 = arith.constant 0 : index
      %c0_13 = arith.constant 0 : index
      %14 = vector.load %arg4[%c0_12, %c0_13] : memref<1x128xf32, #tpu.memory_space<vmem>>, vector<1x128xf32>
      %15 = vector.broadcast %14 : vector<1x128xf32> to vector<64x128xf32>
      %16 = arith.addf %13, %15 : vector<64x128xf32>
      %cst_14 = arith.constant 0.000000e+00 : f32
      %17 = vector.broadcast %cst_14 : f32 to vector<64x128xf32>
      %18 = arith.maximumf %16, %17 : vector<64x128xf32>
      %19 = arith.truncf %18 : vector<64x128xf32> to vector<64x128xbf16>
      %c0_15 = arith.constant 0 : index
      %c0_16 = arith.constant 0 : index
      %20 = vector.load %arg5[%c0_15, %c0_16] : memref<128x128xbf16, #tpu.memory_space<vmem>>, vector<128x128xbf16>
      %cst_17 = arith.constant dense<0.000000e+00> : vector<64x128xf32>
      %21 = tpu.matmul %19, %20, %cst_17 {dimension_numbers = #tpu.dot_dimension_numbers<[1], [0], [0], [1], [0, 0, 1, 1], [], []>} : vector<64x128xbf16>, vector<128x128xbf16>, vector<64x128xf32> -> vector<64x128xf32>
      %c0_18 = arith.constant 0 : index
      %c0_19 = arith.constant 0 : index
      %22 = vector.load %arg6[%c0_18, %c0_19] : memref<1x128xf32, #tpu.memory_space<vmem>>, vector<1x128xf32>
      %23 = vector.broadcast %22 : vector<1x128xf32> to vector<64x128xf32>
      %24 = arith.addf %21, %23 : vector<64x128xf32>
      %cst_20 = arith.constant 0.000000e+00 : f32
      %25 = vector.broadcast %cst_20 : f32 to vector<64x128xf32>
      %26 = arith.maximumf %24, %25 : vector<64x128xf32>
      %27 = arith.truncf %26 : vector<64x128xf32> to vector<64x128xbf16>
      %c0_21 = arith.constant 0 : index
      %c0_22 = arith.constant 0 : index
      %28 = vector.load %arg7[%c0_21, %c0_22] : memref<128x128xbf16, #tpu.memory_space<vmem>>, vector<128x128xbf16>
      %cst_23 = arith.constant dense<0.000000e+00> : vector<64x128xf32>
      %29 = tpu.matmul %27, %28, %cst_23 {dimension_numbers = #tpu.dot_dimension_numbers<[1], [0], [0], [1], [0, 0, 1, 1], [], []>} : vector<64x128xbf16>, vector<128x128xbf16>, vector<64x128xf32> -> vector<64x128xf32>
      %c0_24 = arith.constant 0 : index
      %c0_25 = arith.constant 0 : index
      %30 = vector.load %arg8[%c0_24, %c0_25] : memref<1x128xf32, #tpu.memory_space<vmem>>, vector<1x128xf32>
      %31 = vector.broadcast %30 : vector<1x128xf32> to vector<64x128xf32>
      %32 = arith.addf %29, %31 : vector<64x128xf32>
      %c0_26 = arith.constant 0 : index
      %c0_27 = arith.constant 0 : index
      %33 = vector.load %arg9[%c0_26, %c0_27] : memref<64x128xf32, #tpu.memory_space<vmem>>, vector<64x128xf32>
      tpu.vector_store %arg9[%c0_26, %c0_27], %32 {strides = array<i32>} : memref<64x128xf32, #tpu.memory_space<vmem>>, vector<64x128xf32>,
    } else {
    }
    return
  }
  func.func @transform_0(%arg0: i32, %arg1: i32) -> (i32, i32) {
    %c0_i32 = arith.constant 0 : i32
    return %arg0, %arg1 : i32, i32
  }
  func.func @transform_1(%arg0: i32, %arg1: i32) -> (i32, i32) {
    %c0_i32 = arith.constant 0 : i32
    %c0_i32_0 = arith.constant 0 : i32
    return %arg1, %c0_i32 : i32, i32
  }
  func.func @transform_2(%arg0: i32, %arg1: i32) -> (i32, i32) {
    %c0_i32 = arith.constant 0 : i32
    %c0_i32_0 = arith.constant 0 : i32
    %c0_i32_1 = arith.constant 0 : i32
    return %c0_i32, %c0_i32_0 : i32, i32
  }
  func.func @transform_3(%arg0: i32, %arg1: i32) -> (i32, i32) {
    %c0_i32 = arith.constant 0 : i32
    %c0_i32_0 = arith.constant 0 : i32
    %c0_i32_1 = arith.constant 0 : i32
    return %c0_i32, %c0_i32_0 : i32, i32
  }
  func.func @transform_4(%arg0: i32, %arg1: i32) -> (i32, i32) {
    %c0_i32 = arith.constant 0 : i32
    %c0_i32_0 = arith.constant 0 : i32
    %c0_i32_1 = arith.constant 0 : i32
    return %c0_i32, %c0_i32_0 : i32, i32
  }
  func.func @transform_5(%arg0: i32, %arg1: i32) -> (i32, i32) {
    %c0_i32 = arith.constant 0 : i32
    %c0_i32_0 = arith.constant 0 : i32
    %c0_i32_1 = arith.constant 0 : i32
    return %c0_i32, %c0_i32_0 : i32, i32
  }
  func.func @transform_6(%arg0: i32, %arg1: i32) -> (i32, i32) {
    %c0_i32 = arith.constant 0 : i32
    %c0_i32_0 = arith.constant 0 : i32
    %c0_i32_1 = arith.constant 0 : i32
    return %c0_i32, %c0_i32_0 : i32, i32
  }
  func.func @transform_7(%arg0: i32, %arg1: i32) -> (i32, i32) {
    %c0_i32 = arith.constant 0 : i32
    %c0_i32_0 = arith.constant 0 : i32
    return %arg0, %c0_i32 : i32, i32
  }
}

</mosaic_0001>

<llo_original>
// kernel: mlp_prediction_head.1
$region0: #{mlp_prediction_head.1}
  #allocation0 [shape = 'u32[]', space=smem, size = 0x4, offset = 0x4, fixed_abs, tag = 'smem constant byte address 0x4 - core index']
  #allocation1 [shape = 'u32[144,128]{1,0:T(1,128)}', space=vmem, size = 0x12000, scoped, tag = 'internal scratch']
  #allocation2 [shape = 'f32[64,128]{1,0:T(8,128)}', space=vmem, size = 0x8000, scoped, tag = 'scratch operand']
  %s0 = inlined_call_operand.vmem [shape: f32[64,32], index: 0, kind: input, shape index: {}]
  %s1 = inlined_call_operand.vmem [shape: bf16[32,128], index: 1, kind: input, shape index: {}]
  %s2 = inlined_call_operand.vmem [shape: f32[1,128], index: 2, kind: input, shape index: {}]
  %s3 = inlined_call_operand.vmem [shape: bf16[128,128], index: 3, kind: input, shape index: {}]
  %s4 = inlined_call_operand.vmem [shape: f32[1,128], index: 4, kind: input, shape index: {}]
  %s5 = inlined_call_operand.hbm [shape: bf16[128,128], index: 5, kind: input, shape index: {}]
  %s6 = inlined_call_operand.vmem [shape: f32[1,128], index: 6, kind: input, shape index: {}]
  %s7 = inlined_call_operand.vmem [shape: f32[64,128], index: 7, kind: output, shape index: {}]
  %s8 = sld [smem:[#allocation0]]
  $region50: #{mlp_prediction_head.1} parent=0
    _
  %s10 = ssub.s32 1, %s8
  %s11 = scalar_select 0, %s10, %s8
  $region1: #{mlp_prediction_head.1} parent=0
    #allocation3 [shape = 'u8[32768]{0}', space=vmem, size = 0x8000, scoped, tag = 'input window, operand 5, single buffered']
    #allocation4 [shape = 's32[1]{0}', space=sflag, size = 0x4, scoped, tag = 'scoped memory for mlp_prediction_head.1']
    %12 = vsyncpa [#allocation4], 0
    // Predicated region
    $region2: #{mlp_prediction_head.1} parent=1 // pred_check
      _
    $region3: #{mlp_prediction_head.1} parent=1 // pred_check_branch
      %14 = sbr.rel (0) target = $region5
    $region4: #{mlp_prediction_head.1} parent=1 // pred_region
      _
    $region5: #{mlp_prediction_head.1} parent=1 // pred_fallthru
      _
    // Predicated region
    $region6: #{mlp_prediction_head.1} parent=1 // pred_check
      _
    $region7: #{mlp_prediction_head.1} parent=1 // pred_check_branch
      %16 = sbr.rel (0) target = $region9
    $region8: #{mlp_prediction_head.1} parent=1 // pred_region
      _
    $region9: #{mlp_prediction_head.1} parent=1 // pred_fallthru
      _
    // Predicated region
    $region10: #{mlp_prediction_head.1} parent=1 // pred_check
      _
    $region11: #{mlp_prediction_head.1} parent=1 // pred_check_branch
      %18 = sbr.rel (0) target = $region13
    $region12: #{mlp_prediction_head.1} parent=1 // pred_region
      _
    $region13: #{mlp_prediction_head.1} parent=1 // pred_fallthru
      _
    // Predicated region
    $region14: #{mlp_prediction_head.1} parent=1 // pred_check
      _
    $region15: #{mlp_prediction_head.1} parent=1 // pred_check_branch
      %20 = sbr.rel (0) target = $region17
    $region16: #{mlp_prediction_head.1} parent=1 // pred_region
      _
    $region17: #{mlp_prediction_head.1} parent=1 // pred_fallthru
      _
    // Predicated region
    $region18: #{mlp_prediction_head.1} parent=1 // pred_check
      _
    $region19: #{mlp_prediction_head.1} parent=1 // pred_check_branch
      %22 = sbr.rel (0) target = $region21
    $region20: #{mlp_prediction_head.1} parent=1 // pred_region
      _
    $region21: #{mlp_prediction_head.1} parent=1 // pred_fallthru
      _
    // Predicated region
    $region22: #{mlp_prediction_head.1} parent=1 // pred_check
      _
    $region23: #{mlp_prediction_head.1} parent=1 // pred_check_branch
      %24 = sbr.rel (0) target = $region25
    $region24: #{mlp_prediction_head.1} parent=1 // pred_region
      %s26 = ssub.s32 1024, 1024
      %27 = vsyncadd [#allocation4], %s26
      %s28 = sshll.u32 [#allocation3], 4
      %s29 = int_to_ptr.vmem [resolvable:$true] %s28
      %34 = dma.hbm_to_vmem [thread:$0]  %s5, 1024, %s29, [#allocation4], 64, 64, 4
    $region25: #{mlp_prediction_head.1} parent=1 // pred_fallthru
      _
    // Predicated region
    $region26: #{mlp_prediction_head.1} parent=1 // pred_check
      _
    $region27: #{mlp_prediction_head.1} parent=1 // pred_check_branch
      %36 = sbr.rel (0) target = $region29
    $region28: #{mlp_prediction_head.1} parent=1 // pred_region
      _
    $region29: #{mlp_prediction_head.1} parent=1 // pred_fallthru
      _
    // Predicated region
    $region30: #{mlp_prediction_head.1} parent=1 // pred_check
      _
    $region31: #{mlp_prediction_head.1} parent=1 // pred_check_branch
      %38 = sbr.rel (0) target = $region33
    $region32: #{mlp_prediction_head.1} parent=1 // pred_region
      %39 = dma.done [#allocation4], 1024
    $region33: #{mlp_prediction_head.1} parent=1 // pred_fallthru
      _
    %p41 = scmp.eq.s32.totalorder 0, 0
    // Predicated region
    $region34: #{mlp_prediction_head.1} parent=1 // pred_check
      %p42 = pneg %p41
    $region35: #{mlp_prediction_head.1} parent=1 // pred_check_branch
      %44 = sbr.rel (%p42) target = $region37
    $region36: #{mlp_prediction_head.1} parent=1 // pred_region
      %45 = vst [vmem:[#allocation2] sm:$0xff] 0.0
      %46 = vst [vmem:[#allocation2 + $0x8] sm:$0xff] 0.0
      %47 = vst [vmem:[#allocation2 + $0x10] sm:$0xff] 0.0
      %48 = vst [vmem:[#allocation2 + $0x18] sm:$0xff] 0.0
      %49 = vst [vmem:[#allocation2 + $0x20] sm:$0xff] 0.0
      %50 = vst [vmem:[#allocation2 + $0x28] sm:$0xff] 0.0
      %51 = vst [vmem:[#allocation2 + $0x30] sm:$0xff] 0.0
      %52 = vst [vmem:[#allocation2 + $0x38] sm:$0xff] 0.0
    $region37: #{mlp_prediction_head.1} parent=1 // pred_fallthru
      _
    %v53 = vld [vmem:[#allocation2] sm:$0xff]
    %v54 = vld [vmem:[#allocation2 + $0x8] sm:$0xff]
    %v55 = vld [vmem:[#allocation2 + $0x10] sm:$0xff]
    %v56 = vld [vmem:[#allocation2 + $0x18] sm:$0xff]
    %v57 = vld [vmem:[#allocation2 + $0x20] sm:$0xff]
    %v58 = vld [vmem:[#allocation2 + $0x28] sm:$0xff]
    %v59 = vld [vmem:[#allocation2 + $0x30] sm:$0xff]
    %v60 = vld [vmem:[#allocation2 + $0x38] sm:$0xff]
    %v61 = vld [vmem:[%s0] sm:$0xff]
    %v62 = vld [vmem:[%s0 + $0x8] sm:$0xff]
    %v63 = vld [vmem:[%s0 + $0x10] sm:$0xff]
    %v64 = vld [vmem:[%s0 + $0x18] sm:$0xff]
    %v65 = vld [vmem:[%s0 + $0x20] sm:$0xff]
    %v66 = vld [vmem:[%s0 + $0x28] sm:$0xff]
    %v67 = vld [vmem:[%s0 + $0x30] sm:$0xff]
    %v68 = vld [vmem:[%s0 + $0x38] sm:$0xff]
    %v69 = vpack.c.bf16 %v62, %v61
    %v70 = vpack.c.bf16 %v64, %v63
    %v71 = vpack.c.bf16 %v66, %v65
    %v72 = vpack.c.bf16 %v68, %v67
    %v73 = vld [vmem:[%s1] sm:$0xf]
    %v74 = vld [vmem:[%s1 + $0x4] sm:$0xf]
    %v75 = vld [vmem:[%s1 + $0x8] sm:$0xf]
    %v76 = vld [vmem:[%s1 + $0xc] sm:$0xf]
    %v81 = vunpack.c.l.b16 %v73
    %v82 = vunpack.c.l.b16 %v74
    %v83 = vunpack.c.l.b16 %v75
    %v84 = vunpack.c.l.b16 %v76
    %v85 = vpack.c.b16 %v82, %v81
    %v86 = vpack.c.b16 %v84, %v83
    %vm89 = vcmask 261120
    %v91 = vsel %vm89, %v69, 0
    %v94 = vsel %vm89, %v70, 0
    %v97 = vsel %vm89, %v71, 0
    %v100 = vsel %vm89, %v72, 0
    %102 = vmatprep.subr.bf16.mxu0 0
    %103 = vmatpush1.bf16.msra.mxu0 %v85
    %104 = vmatprep.subr.bf16.mxu0 0
    %105 = vmatpush1.bf16.msra.mxu0 %v86
    %106 = vmatprep.subr.bf16.mxu0 0
    %107 = vmatpush1.bf16.msra.mxu0 0
    %108 = vmatprep.subr.bf16.mxu0 0
    %109 = vmatpush1.bf16.msra.mxu0 0
    %110 = vmatprep.subr.bf16.mxu0 0
    %111 = vmatpush1.bf16.msra.mxu0 0
    %112 = vmatprep.subr.bf16.mxu0 0
    %113 = vmatpush1.bf16.msra.mxu0 0
    %114 = vmatprep.subr.bf16.mxu0 0
    %115 = vmatpush1.bf16.msra.mxu0 0
    %116 = vmatprep.subr.bf16.mxu0 0
    %117 = vmatpush1.bf16.msra.mxu0 0
    %118 = vmatprep.subr.bf16.mxu0 0
    %119 = vmatpush1.bf16.msra.mxu0 0
    %120 = vmatprep.subr.bf16.mxu0 0
    %121 = vmatpush1.bf16.msra.mxu0 0
    %122 = vmatprep.subr.bf16.mxu0 0
    %123 = vmatpush1.bf16.msra.mxu0 0
    %124 = vmatprep.subr.bf16.mxu0 0
    %125 = vmatpush1.bf16.msra.mxu0 0
    %126 = vmatprep.subr.bf16.mxu0 0
    %127 = vmatpush1.bf16.msra.mxu0 0
    %128 = vmatprep.subr.bf16.mxu0 0
    %129 = vmatpush1.bf16.msra.mxu0 0
    %130 = vmatprep.subr.bf16.mxu0 0
    %131 = vmatpush1.bf16.msra.mxu0 0
    %132 = vmatprep.subr.bf16.mxu0 0
    %133 = vmatpush1.bf16.msra.mxu0 0
    %134 = vmatprep.mubr.bf16.mxu0 0
    %135 = vmatmul.mubr.bf16.gmra.mrb[0].mxu0 %v91
    %v136 = vpop.f32.mrb[0].mxu0
    %v137 = vadd.f32 0.0, %v136
    %v138 = vpop.f32.mrb[0].mxu0
    %v139 = vpop.f32.mrb[0].mxu0
    %v140 = vadd.f32 0.0, %v139
    %v141 = vpop.f32.mrb[0].mxu0
    %142 = vmatprep.mubr.bf16.mxu0 0
    %143 = vmatmul.mubr.bf16.gmra.mrb[0].mxu0 %v94
    %v144 = vpop.f32.mrb[0].mxu0
    %v145 = vadd.f32 0.0, %v144
    %v146 = vpop.f32.mrb[0].mxu0
    %v147 = vpop.f32.mrb[0].mxu0
    %v148 = vadd.f32 0.0, %v147
    %v149 = vpop.f32.mrb[0].mxu0
    %150 = vmatprep.mubr.bf16.mxu0 0
    %151 = vmatmul.mubr.bf16.gmra.mrb[0].mxu0 %v97
    %v152 = vpop.f32.mrb[0].mxu0
    %v153 = vadd.f32 0.0, %v152
    %v154 = vpop.f32.mrb[0].mxu0
    %v155 = vpop.f32.mrb[0].mxu0
    %v156 = vadd.f32 0.0, %v155
    %v157 = vpop.f32.mrb[0].mxu0
    %158 = vmatprep.mubr.bf16.mxu0 0
    %159 = vmatmul.mubr.bf16.gmra.mrb[0].mxu0 %v100
    %v160 = vpop.f32.mrb[0].mxu0
    %v161 = vadd.f32 0.0, %v160
    %v162 = vpop.f32.mrb[0].mxu0
    %v163 = vpop.f32.mrb[0].mxu0
    %v164 = vadd.f32 0.0, %v163
    %v165 = vpop.f32.mrb[0].mxu0
    %166 = vdwg.mxu0
    %v167 = vadd.f32 %v53, %v137
    %v168 = vadd.f32 %v54, %v140
    %v169 = vadd.f32 %v55, %v145
    %v170 = vadd.f32 %v56, %v148
    %v171 = vadd.f32 %v57, %v153
    %v172 = vadd.f32 %v58, %v156
    %v173 = vadd.f32 %v59, %v161
    %v174 = vadd.f32 %v60, %v164
    %175 = vst [vmem:[#allocation2] sm:$0xff] %v167
    %176 = vst [vmem:[#allocation2 + $0x8] sm:$0xff] %v168
    %177 = vst [vmem:[#allocation2 + $0x10] sm:$0xff] %v169
    %178 = vst [vmem:[#allocation2 + $0x18] sm:$0xff] %v170
    %179 = vst [vmem:[#allocation2 + $0x20] sm:$0xff] %v171
    %180 = vst [vmem:[#allocation2 + $0x28] sm:$0xff] %v172
    %181 = vst [vmem:[#allocation2 + $0x30] sm:$0xff] %v173
    %182 = vst [vmem:[#allocation2 + $0x38] sm:$0xff] %v174
    // Predicated region
    $region38: #{mlp_prediction_head.1} parent=1 // pred_check
      %p183 = pneg %p41
    $region39: #{mlp_prediction_head.1} parent=1 // pred_check_branch
      %185 = sbr.rel (%p183) target = $region41
    $region40: #{mlp_prediction_head.1} parent=1 // pred_region
      %v186 = vld [vmem:[#allocation2] sm:$0xff]
      %v187 = vld [vmem:[#allocation2 + $0x8] sm:$0xff]
      %v188 = vld [vmem:[#allocation2 + $0x10] sm:$0xff]
      %v189 = vld [vmem:[#allocation2 + $0x18] sm:$0xff]
      %v190 = vld [vmem:[#allocation2 + $0x20] sm:$0xff]
      %v191 = vld [vmem:[#allocation2 + $0x28] sm:$0xff]
      %v192 = vld [vmem:[#allocation2 + $0x30] sm:$0xff]
      %v193 = vld [vmem:[#allocation2 + $0x38] sm:$0xff]
      %v194 = vld [vmem:[%s2] sm:$0x1]
      %v196 = vlaneseq
      %v197 = vshrl.u32 %v196, 7
      %v198 = vsub.s32 0, %v197
      %v199 = vrot.slane %v194, %v198
      %v201 = vadd.f32 %v186, %v199
      %v202 = vadd.f32 %v187, %v199
      %v203 = vadd.f32 %v188, %v199
      %v204 = vadd.f32 %v189, %v199
      %v205 = vadd.f32 %v190, %v199
      %v206 = vadd.f32 %v191, %v199
      %v207 = vadd.f32 %v192, %v199
      %v208 = vadd.f32 %v193, %v199
      %v209 = vmax.f32 %v201, 0.0
      %v210 = vmax.f32 %v202, 0.0
      %v211 = vmax.f32 %v203, 0.0
      %v212 = vmax.f32 %v204, 0.0
      %v213 = vmax.f32 %v205, 0.0
      %v214 = vmax.f32 %v206, 0.0
      %v215 = vmax.f32 %v207, 0.0
      %v216 = vmax.f32 %v208, 0.0
      %v217 = vpack.c.bf16 %v210, %v209
      %v218 = vpack.c.bf16 %v212, %v211
      %v219 = vpack.c.bf16 %v214, %v213
      %v220 = vpack.c.bf16 %v216, %v215
      %v221 = vld [vmem:[%s3] sm:$0xf]
      %v222 = vld [vmem:[%s3 + $0x4] sm:$0xf]
      %v223 = vld [vmem:[%s3 + $0x8] sm:$0xf]
      %v224 = vld [vmem:[%s3 + $0xc] sm:$0xf]
      %v225 = vld [vmem:[%s3 + $0x10] sm:$0xf]
      %v226 = vld [vmem:[%s3 + $0x14] sm:$0xf]
      %v227 = vld [vmem:[%s3 + $0x18] sm:$0xf]
      %v228 = vld [vmem:[%s3 + $0x1c] sm:$0xf]
      %v229 = vld [vmem:[%s3 + $0x20] sm:$0xf]
      %v230 = vld [vmem:[%s3 + $0x24] sm:$0xf]
      %v231 = vld [vmem:[%s3 + $0x28] sm:$0xf]
      %v232 = vld [vmem:[%s3 + $0x2c] sm:$0xf]
      %v233 = vld [vmem:[%s3 + $0x30] sm:$0xf]
      %v234 = vld [vmem:[%s3 + $0x34] sm:$0xf]
      %v235 = vld [vmem:[%s3 + $0x38] sm:$0xf]
      %v236 = vld [vmem:[%s3 + $0x3c] sm:$0xf]
      %v237 = vld [vmem:[%s4] sm:$0x1]
      %v239 = vlaneseq
      %v240 = vshrl.u32 %v239, 7
      %v241 = vsub.s32 0, %v240
      %v242 = vrot.slane %v237, %v241
      %v260 = vunpack.c.l.b16 %v221
      %v261 = vunpack.c.l.b16 %v222
      %v262 = vunpack.c.l.b16 %v223
      %v263 = vunpack.c.l.b16 %v224
      %v264 = vunpack.c.l.b16 %v225
      %v265 = vunpack.c.l.b16 %v226
      %v266 = vunpack.c.l.b16 %v227
      %v267 = vunpack.c.l.b16 %v228
      %v268 = vunpack.c.l.b16 %v229
      %v269 = vunpack.c.l.b16 %v230
      %v270 = vunpack.c.l.b16 %v231
      %v271 = vunpack.c.l.b16 %v232
      %v272 = vunpack.c.l.b16 %v233
      %v273 = vunpack.c.l.b16 %v234
      %v274 = vunpack.c.l.b16 %v235
      %v275 = vunpack.c.l.b16 %v236
      %v276 = vpack.c.b16 %v261, %v260
      %v277 = vpack.c.b16 %v263, %v262
      %v278 = vpack.c.b16 %v265, %v264
      %v279 = vpack.c.b16 %v267, %v266
      %v280 = vpack.c.b16 %v269, %v268
      %v281 = vpack.c.b16 %v271, %v270
      %v282 = vpack.c.b16 %v273, %v272
      %v283 = vpack.c.b16 %v275, %v274
      %292 = vmatprep.subr.bf16.mxu0 0
      %293 = vmatpush1.bf16.msra.mxu0 %v276
      %294 = vmatprep.subr.bf16.mxu0 0
      %295 = vmatpush1.bf16.msra.mxu0 %v277
      %296 = vmatprep.subr.bf16.mxu0 0
      %297 = vmatpush1.bf16.msra.mxu0 %v278
      %298 = vmatprep.subr.bf16.mxu0 0
      %299 = vmatpush1.bf16.msra.mxu0 %v279
      %300 = vmatprep.subr.bf16.mxu0 0
      %301 = vmatpush1.bf16.msra.mxu0 %v280
      %302 = vmatprep.subr.bf16.mxu0 0
      %303 = vmatpush1.bf16.msra.mxu0 %v281
      %304 = vmatprep.subr.bf16.mxu0 0
      %305 = vmatpush1.bf16.msra.mxu0 %v282
      %306 = vmatprep.subr.bf16.mxu0 0
      %307 = vmatpush1.bf16.msra.mxu0 %v283
      %308 = vmatprep.subr.bf16.mxu0 0
      %309 = vmatpush1.bf16.msra.mxu0 0
      %310 = vmatprep.subr.bf16.mxu0 0
      %311 = vmatpush1.bf16.msra.mxu0 0
      %312 = vmatprep.subr.bf16.mxu0 0
      %313 = vmatpush1.bf16.msra.mxu0 0
      %314 = vmatprep.subr.bf16.mxu0 0
      %315 = vmatpush1.bf16.msra.mxu0 0
      %316 = vmatprep.subr.bf16.mxu0 0
      %317 = vmatpush1.bf16.msra.mxu0 0
      %318 = vmatprep.subr.bf16.mxu0 0
      %319 = vmatpush1.bf16.msra.mxu0 0
      %320 = vmatprep.subr.bf16.mxu0 0
      %321 = vmatpush1.bf16.msra.mxu0 0
      %322 = vmatprep.subr.bf16.mxu0 0
      %323 = vmatpush1.bf16.msra.mxu0 0
      %324 = vmatprep.mubr.bf16.mxu0 0
      %325 = vmatmul.mubr.bf16.gmra.mrb[0].mxu0 %v217
      %v326 = vpop.f32.mrb[0].mxu0
      %v327 = vadd.f32 %v242, %v326
      %v328 = vpop.f32.mrb[0].mxu0
      %v329 = vpop.f32.mrb[0].mxu0
      %v330 = vadd.f32 %v242, %v329
      %v331 = vpop.f32.mrb[0].mxu0
      %332 = vmatprep.mubr.bf16.mxu0 0
      %333 = vmatmul.mubr.bf16.gmra.mrb[0].mxu0 %v218
      %v334 = vpop.f32.mrb[0].mxu0
      %v335 = vadd.f32 %v242, %v334
      %v336 = vpop.f32.mrb[0].mxu0
      %v337 = vpop.f32.mrb[0].mxu0
      %v338 = vadd.f32 %v242, %v337
      %v339 = vpop.f32.mrb[0].mxu0
      %340 = vmatprep.mubr.bf16.mxu0 0
      %341 = vmatmul.mubr.bf16.gmra.mrb[0].mxu0 %v219
      %v342 = vpop.f32.mrb[0].mxu0
      %v343 = vadd.f32 %v242, %v342
      %v344 = vpop.f32.mrb[0].mxu0
      %v345 = vpop.f32.mrb[0].mxu0
      %v346 = vadd.f32 %v242, %v345
      %v347 = vpop.f32.mrb[0].mxu0
      %348 = vmatprep.mubr.bf16.mxu0 0
      %349 = vmatmul.mubr.bf16.gmra.mrb[0].mxu0 %v220
      %v350 = vpop.f32.mrb[0].mxu0
      %v351 = vadd.f32 %v242, %v350
      %v352 = vpop.f32.mrb[0].mxu0
      %v353 = vpop.f32.mrb[0].mxu0
      %v354 = vadd.f32 %v242, %v353
      %v355 = vpop.f32.mrb[0].mxu0
      %356 = vdwg.mxu0
      %v357 = vmax.f32 %v327, 0.0
      %v358 = vmax.f32 %v330, 0.0
      %v359 = vmax.f32 %v335, 0.0
      %v360 = vmax.f32 %v338, 0.0
      %v361 = vmax.f32 %v343, 0.0
      %v362 = vmax.f32 %v346, 0.0
      %v363 = vmax.f32 %v351, 0.0
      %v364 = vmax.f32 %v354, 0.0
      %v365 = vpack.c.bf16 %v358, %v357
      %v366 = vpack.c.bf16 %v360, %v359
      %v367 = vpack.c.bf16 %v362, %v361
      %v368 = vpack.c.bf16 %v364, %v363
      %v369 = vld [vmem:[#allocation3] sm:$0xf]
      %v370 = vld [vmem:[#allocation3 + $0x4] sm:$0xf]
      %v371 = vld [vmem:[#allocation3 + $0x8] sm:$0xf]
      %v372 = vld [vmem:[#allocation3 + $0xc] sm:$0xf]
      %v373 = vld [vmem:[#allocation3 + $0x10] sm:$0xf]
      %v374 = vld [vmem:[#allocation3 + $0x14] sm:$0xf]
      %v375 = vld [vmem:[#allocation3 + $0x18] sm:$0xf]
      %v376 = vld [vmem:[#allocation3 + $0x1c] sm:$0xf]
      %v377 = vld [vmem:[#allocation3 + $0x20] sm:$0xf]
      %v378 = vld [vmem:[#allocation3 + $0x24] sm:$0xf]
      %v379 = vld [vmem:[#allocation3 + $0x28] sm:$0xf]
      %v380 = vld [vmem:[#allocation3 + $0x2c] sm:$0xf]
      %v381 = vld [vmem:[#allocation3 + $0x30] sm:$0xf]
      %v382 = vld [vmem:[#allocation3 + $0x34] sm:$0xf]
      %v383 = vld [vmem:[#allocation3 + $0x38] sm:$0xf]
      %v384 = vld [vmem:[#allocation3 + $0x3c] sm:$0xf]
      %v385 = vld [vmem:[%s6] sm:$0x1]
      %v387 = vlaneseq
      %v388 = vshrl.u32 %v387, 7
      %v389 = vsub.s32 0, %v388
      %v390 = vrot.slane %v385, %v389
      %v408 = vunpack.c.l.b16 %v369
      %v409 = vunpack.c.l.b16 %v370
      %v410 = vunpack.c.l.b16 %v371
      %v411 = vunpack.c.l.b16 %v372
      %v412 = vunpack.c.l.b16 %v373
      %v413 = vunpack.c.l.b16 %v374
      %v414 = vunpack.c.l.b16 %v375
      %v415 = vunpack.c.l.b16 %v376
      %v416 = vunpack.c.l.b16 %v377
      %v417 = vunpack.c.l.b16 %v378
      %v418 = vunpack.c.l.b16 %v379
      %v419 = vunpack.c.l.b16 %v380
      %v420 = vunpack.c.l.b16 %v381
      %v421 = vunpack.c.l.b16 %v382
      %v422 = vunpack.c.l.b16 %v383
      %v423 = vunpack.c.l.b16 %v384
      %v424 = vpack.c.b16 %v409, %v408
      %v425 = vpack.c.b16 %v411, %v410
      %v426 = vpack.c.b16 %v413, %v412
      %v427 = vpack.c.b16 %v415, %v414
      %v428 = vpack.c.b16 %v417, %v416
      %v429 = vpack.c.b16 %v419, %v418
      %v430 = vpack.c.b16 %v421, %v420
      %v431 = vpack.c.b16 %v423, %v422
      %440 = vmatprep.subr.bf16.mxu0 0
      %441 = vmatpush1.bf16.msra.mxu0 %v424
      %442 = vmatprep.subr.bf16.mxu0 0
      %443 = vmatpush1.bf16.msra.mxu0 %v425
      %444 = vmatprep.subr.bf16.mxu0 0
      %445 = vmatpush1.bf16.msra.mxu0 %v426
      %446 = vmatprep.subr.bf16.mxu0 0
      %447 = vmatpush1.bf16.msra.mxu0 %v427
      %448 = vmatprep.subr.bf16.mxu0 0
      %449 = vmatpush1.bf16.msra.mxu0 %v428
      %450 = vmatprep.subr.bf16.mxu0 0
      %451 = vmatpush1.bf16.msra.mxu0 %v429
      %452 = vmatprep.subr.bf16.mxu0 0
      %453 = vmatpush1.bf16.msra.mxu0 %v430
      %454 = vmatprep.subr.bf16.mxu0 0
      %455 = vmatpush1.bf16.msra.mxu0 %v431
      %456 = vmatprep.subr.bf16.mxu0 0
      %457 = vmatpush1.bf16.msra.mxu0 0
      %458 = vmatprep.subr.bf16.mxu0 0
      %459 = vmatpush1.bf16.msra.mxu0 0
      %460 = vmatprep.subr.bf16.mxu0 0
      %461 = vmatpush1.bf16.msra.mxu0 0
      %462 = vmatprep.subr.bf16.mxu0 0
      %463 = vmatpush1.bf16.msra.mxu0 0
      %464 = vmatprep.subr.bf16.mxu0 0
      %465 = vmatpush1.bf16.msra.mxu0 0
      %466 = vmatprep.subr.bf16.mxu0 0
      %467 = vmatpush1.bf16.msra.mxu0 0
      %468 = vmatprep.subr.bf16.mxu0 0
      %469 = vmatpush1.bf16.msra.mxu0 0
      %470 = vmatprep.subr.bf16.mxu0 0
      %471 = vmatpush1.bf16.msra.mxu0 0
      %472 = vmatprep.mubr.bf16.mxu0 0
      %473 = vmatmul.mubr.bf16.gmra.mrb[0].mxu0 %v365
      %v474 = vpop.f32.mrb[0].mxu0
      %v475 = vadd.f32 %v390, %v474
      %v476 = vpop.f32.mrb[0].mxu0
      %v477 = vpop.f32.mrb[0].mxu0
      %v478 = vadd.f32 %v390, %v477
      %v479 = vpop.f32.mrb[0].mxu0
      %480 = vmatprep.mubr.bf16.mxu0 0
      %481 = vmatmul.mubr.bf16.gmra.mrb[0].mxu0 %v366
      %v482 = vpop.f32.mrb[0].mxu0
      %v483 = vadd.f32 %v390, %v482
      %v484 = vpop.f32.mrb[0].mxu0
      %v485 = vpop.f32.mrb[0].mxu0
      %v486 = vadd.f32 %v390, %v485
      %v487 = vpop.f32.mrb[0].mxu0
      %488 = vmatprep.mubr.bf16.mxu0 0
      %489 = vmatmul.mubr.bf16.gmra.mrb[0].mxu0 %v367
      %v490 = vpop.f32.mrb[0].mxu0
      %v491 = vadd.f32 %v390, %v490
      %v492 = vpop.f32.mrb[0].mxu0
      %v493 = vpop.f32.mrb[0].mxu0
      %v494 = vadd.f32 %v390, %v493
      %v495 = vpop.f32.mrb[0].mxu0
      %496 = vmatprep.mubr.bf16.mxu0 0
      %497 = vmatmul.mubr.bf16.gmra.mrb[0].mxu0 %v368
      %v498 = vpop.f32.mrb[0].mxu0
      %v499 = vadd.f32 %v390, %v498
      %v500 = vpop.f32.mrb[0].mxu0
      %v501 = vpop.f32.mrb[0].mxu0
      %v502 = vadd.f32 %v390, %v501
      %v503 = vpop.f32.mrb[0].mxu0
      %504 = vdwg.mxu0
      %505 = vst [vmem:[%s7] sm:$0xff] %v475
      %506 = vst [vmem:[%s7 + $0x8] sm:$0xff] %v478
      %507 = vst [vmem:[%s7 + $0x10] sm:$0xff] %v483
      %508 = vst [vmem:[%s7 + $0x18] sm:$0xff] %v486
      %509 = vst [vmem:[%s7 + $0x20] sm:$0xff] %v491
      %510 = vst [vmem:[%s7 + $0x28] sm:$0xff] %v494
      %511 = vst [vmem:[%s7 + $0x30] sm:$0xff] %v499
      %512 = vst [vmem:[%s7 + $0x38] sm:$0xff] %v502
    $region41: #{mlp_prediction_head.1} parent=1 // pred_fallthru
      _
    // Predicated region
    $region42: #{mlp_prediction_head.1} parent=1 // pred_check
      _
    $region43: #{mlp_prediction_head.1} parent=1 // pred_check_branch
      %514 = sbr.rel (0) target = $region45
    $region44: #{mlp_prediction_head.1} parent=1 // pred_region
      _
    $region45: #{mlp_prediction_head.1} parent=1 // pred_fallthru
      _
    // Predicated region
    $region46: #{mlp_prediction_head.1} parent=1 // pred_check
      _
    $region47: #{mlp_prediction_head.1} parent=1 // pred_check_branch
      %516 = sbr.rel (0) target = $region49
    $region48: #{mlp_prediction_head.1} parent=1 // pred_region
      _
    $region49: #{mlp_prediction_head.1} parent=1 // pred_fallthru
      _
    %517 = vsyncpa [#allocation4], 1

</llo_original>
